<compile_context>
chip_gen: v6e
topology: v6e:2x2x1
jax: 0.10.0
libtpu: 0.0.40
codegen_flags: <defaults>
</compile_context>

<pallas_src>
import functools
import math

import jax
import jax.numpy as jnp
from jax.experimental import pallas as pl
from jax.experimental.pallas import tpu as pltpu


# --------------------------------------------------------------------------- #
# Small helpers
# --------------------------------------------------------------------------- #
def _round_up(n: int, m: int) -> int:
    return ((n + m - 1) // m) * m


def _pick_tile(total: int, desired: int, quantum: int) -> int:
    """Largest multiple of `quantum` that divides `total` and is <= desired."""
    t = max(quantum, (min(desired, total) // quantum) * quantum)
    while total % t != 0:
        t -= quantum
    return t


def _pick_row_tile(rows: int, desired: int, quantum: int = 16):
    """Row-tile size (multiple of `quantum`) and padded row count.

    Prefers (a) a tile that divides round_up(rows, quantum) exactly, so no
    fully-padded row tiles are computed and discarded, and (b) at least two
    row tiles so the 'parallel' axis can feed both v7x TensorCores."""
    desired = max(quantum, (desired // quantum) * quantum)
    rows_q = _round_up(rows, quantum)
    if rows_q <= desired:
        half = rows_q // 2
        if half >= quantum and half % quantum == 0:
            return half, rows_q                     # >= 2 tiles for megacore
        return rows_q, rows_q
    lo = max(quantum, (desired // 2 // quantum) * quantum)
    for bm in range(desired, lo - 1, -quantum):
        if rows_q % bm == 0:
            return bm, rows_q                       # exact divisor: no waste
    return desired, _round_up(rows, desired)        # bounded padding fallback


def _vmem_budget_bytes() -> int:
    """~80% of physical per-core VMEM (leaves headroom for compiler scratch):
    ~51 MiB on v7x (64 MiB/TC), ~102 MiB on v5e/v6e (128 MiB)."""
    try:
        cap = int(pltpu.get_tpu_info().vmem_capacity_bytes)
    except Exception:
        cap = 64 * 1024 * 1024                      # conservative (v7x per-TC)
    return max(32 * 1024 * 1024, int(cap * 0.80))


# --------------------------------------------------------------------------- #
# Kernel body (handles resident / k-tiled, prng / mask / no dropout)
# --------------------------------------------------------------------------- #
def _ffn_kernel(*refs, dropout_p: float, dropout_impl: str, tiled: bool,
                use_acc: bool):
    refs = list(refs)
    seed_ref = refs.pop(0) if dropout_impl == "prng" else None
    x_ref, w1t_ref, b1_ref, w2t_ref, b2_ref = refs[:5]
    refs = refs[5:]
    mask_ref = refs.pop(0) if dropout_impl == "mask" else None
    o_ref = refs.pop(0)
    acc_ref = refs.pop(0) if use_acc else None

    # linear_1 (+ bias) + relu, f32 accumulation on the MXU.
    h = jnp.dot(x_ref[...], w1t_ref[...], preferred_element_type=jnp.float32)
    h = jnp.maximum(h + b1_ref[...], 0.0)

    if dropout_p > 0.0:
        if dropout_impl == "prng":
            # In-kernel PRNG: nothing streamed from HBM; unique stream per tile.
            if tiled:
                pltpu.prng_seed(seed_ref[0], pl.program_id(0), pl.program_id(1))
            else:
                pltpu.prng_seed(seed_ref[0], pl.program_id(0))
            bits = pltpu.prng_random_bits(h.shape)
            if bits.dtype != jnp.int32:
                bits = pltpu.bitcast(bits, jnp.int32)
            bits = jnp.bitwise_and(bits, jnp.int32(0x7FFFFFFF))  # uniform [0, 2^31)
            thr = jnp.int32(min(int(round(dropout_p * 2147483648.0)), 2147483647))
            keep = bits >= thr
        else:
            thr = jnp.int32(min(int(round(dropout_p * 256.0)), 255))
            keep = mask_ref[...].astype(jnp.int32) >= thr
        # The 1/(1-p) inverted-dropout scale is folded into W2 by the wrapper.
        h = jnp.where(keep, h, 0.0)

    # linear_2 (full or per-hidden-slice partial) product, f32 accumulation.
    part = jnp.dot(h.astype(w2t_ref.dtype), w2t_ref[...],
                   preferred_element_type=jnp.float32)

    if not tiled:
        o_ref[...] = (part + b2_ref[...]).astype(o_ref.dtype)
        return

    k = pl.program_id(1)
    tgt = acc_ref if use_acc else o_ref            # f32 out: accumulate in place

    @pl.when(k == 0)
    def _init():
        tgt[...] = jnp.zeros_like(tgt)

    tgt[...] += part

    @pl.when(k == pl.num_programs(1) - 1)
    def _finalize():
        if use_acc:
            o_ref[...] = (acc_ref[...] + b2_ref[...]).astype(o_ref.dtype)
        else:
            o_ref[...] += b2_ref[...]


# --------------------------------------------------------------------------- #
# Wrapper: geometry, padding, path selection, pallas_call
# --------------------------------------------------------------------------- #
def _ffn_forward(x, w1t, b1, w2t, b2, *, dropout_p, dropout_key, dropout_impl,
                 compute_dtype, block_rows, hidden_tile):
    batch, seq, d_model = x.shape
    d_hidden = w1t.shape[1]
    rows = batch * seq
    out_dtype = jnp.dtype(x.dtype)

    if compute_dtype is not None:
        compute_dtype = jnp.dtype(compute_dtype)
        x = x.astype(compute_dtype)
        w1t = w1t.astype(compute_dtype)
        w2t = w2t.astype(compute_dtype)

    if dropout_p > 0.0:
        # Fold the inverted-dropout scale into W2 (kernel then just selects).
        w2t = (w2t.astype(jnp.float32) / (1.0 - dropout_p)).astype(w2t.dtype)

    xb = jnp.dtype(x.dtype).itemsize
    wb = jnp.dtype(w1t.dtype).itemsize
    ob = out_dtype.itemsize

    dm_p = _round_up(d_model, 128)
    budget = _vmem_budget_bytes()

    use_prng = dropout_p > 0.0 and dropout_impl == "prng"
    use_mask = dropout_p > 0.0 and dropout_impl == "mask"

    # ------------------------ resident-weight fast path ------------------------ #
    dh_full = _round_up(d_hidden, 128)
    # Operands are double-buffered by the pipeline; h / bits intermediates in f32.
    weight_bytes = 2 * (dm_p * dh_full + dh_full * dm_p) * wb + 2 * (dh_full + dm_p) * 4

    def _resident_bytes(bm):
        per_tile = 2 * bm * dm_p * xb + 2 * bm * dm_p * ob + 2 * bm * dh_full * 4
        if use_mask:
            per_tile += 2 * bm * dh_full
        return weight_bytes + per_tile

    bm_try = min(max(16, (block_rows // 16) * 16), _round_up(rows, 16))
    while bm_try > 16 and _resident_bytes(bm_try) > budget:
        bm_try = max(16, ((bm_try // 2) // 16) * 16)

    if _resident_bytes(bm_try) <= budget:
        # Weights DMA'd once and kept resident; no hidden-dim grid axis.
        dh_p = dh_full
        bm, rows_p = _pick_row_tile(rows, bm_try)
        grid = (rows_p // bm,)
        tiled, use_acc = False, False
        in_specs = [
            pl.BlockSpec((bm, dm_p), lambda i, *_: (i, 0)),     # x row tile
            pl.BlockSpec((dm_p, dh_p), lambda i, *_: (0, 0)),   # W1^T (resident)
            pl.BlockSpec((1, dh_p), lambda i, *_: (0, 0)),      # b1   (resident)
            pl.BlockSpec((dh_p, dm_p), lambda i, *_: (0, 0)),   # W2^T (resident)
            pl.BlockSpec((1, dm_p), lambda i, *_: (0, 0)),      # b2   (resident)
        ]
        mask_spec = pl.BlockSpec((bm, dh_p), lambda i, *_: (i, 0))
        out_spec = pl.BlockSpec((bm, dm_p), lambda i, *_: (i, 0))
        scratch = []
        dim_sem = ("parallel",)
        est = _resident_bytes(bm)
    else:
        # -------------------- k-tiled fallback (huge d_hidden) ------------------ #
        dh_p = _round_up(d_hidden, 256)              # keep tk a multiple of 256
        tk = _pick_tile(dh_p, max(hidden_tile, 256), 256)
        use_acc = out_dtype != jnp.dtype(jnp.float32)

        def _tiled_bytes(bm, tk):
            per = 2 * (bm * dm_p * xb + dm_p * tk * wb + tk * 4
                       + tk * dm_p * wb + dm_p * 4 + bm * dm_p * ob)
            per += 2 * bm * tk * 4                   # h / random-bits intermediate
            if use_acc:
                per += bm * dm_p * 4                 # f32 accumulator scratch
            if use_mask:
                per += 2 * bm * tk
            return per

        bm_try = min(max(16, (block_rows // 16) * 16), _round_up(rows, 16))
        while bm_try > 16 and _tiled_bytes(bm_try, tk) > budget:
            bm_try = max(16, ((bm_try // 2) // 16) * 16)
        while tk > 256 and _tiled_bytes(bm_try, tk) > budget:
            tk = _pick_tile(dh_p, tk - 256, 256)
        bm, rows_p = _pick_row_tile(rows, bm_try)
        grid = (rows_p // bm, dh_p // tk)
        tiled = True
        # TODO(synk): sweep pipeline_mode=pl.Buffered(3) on the weight specs for
        # v5e/v6e (128 MiB VMEM) where the per-slice weight DMA may be exposed.
        in_specs = [
            pl.BlockSpec((bm, dm_p), lambda i, k, *_: (i, 0)),  # x row tile
            pl.BlockSpec((dm_p, tk), lambda i, k, *_: (0, k)),  # W1^T hidden slice
            pl.BlockSpec((1, tk),    lambda i, k, *_: (0, k)),  # b1 hidden slice
            pl.BlockSpec((tk, dm_p), lambda i, k, *_: (k, 0)),  # W2^T hidden slice
            pl.BlockSpec((1, dm_p),  lambda i, k, *_: (0, 0)),  # b2
        ]
        mask_spec = pl.BlockSpec((bm, tk), lambda i, k, *_: (i, k))
        out_spec = pl.BlockSpec((bm, dm_p), lambda i, k, *_: (i, 0))
        scratch = [pltpu.VMEM((bm, dm_p), jnp.float32)] if use_acc else []
        dim_sem = ("parallel", "arbitrary")
        est = _tiled_bytes(bm, tk)

    # ---- padded operands (lane dims -> multiples of 128, rows -> rows_p) ------- #
    x2d = x.reshape(rows, d_model)
    xp = jnp.pad(x2d, ((0, rows_p - rows), (0, dm_p - d_model)))
    w1tp = jnp.pad(w1t, ((0, dm_p - d_model), (0, dh_p - d_hidden)))
    b1p = jnp.pad(b1.astype(jnp.float32).reshape(1, d_hidden),
                  ((0, 0), (0, dh_p - d_hidden)))
    w2tp = jnp.pad(w2t, ((0, dh_p - d_hidden), (0, dm_p - d_model)))
    b2p = jnp.pad(b2.astype(jnp.float32).reshape(1, d_model),
                  ((0, 0), (0, dm_p - d_model)))
    operands = [xp, w1tp, b1p, w2tp, b2p]

    scalar_ops = []
    num_prefetch = 0
    if use_prng:
        seed = jax.random.randint(dropout_key, (1,), 0, jnp.iinfo(jnp.int32).max,
                                  dtype=jnp.int32)
        scalar_ops = [seed]
        num_prefetch = 1
    elif use_mask:
        # TODO(synk): drop this host-mask path once in-kernel PRNG lowering is
        # guaranteed everywhere; uint8 keeps mask HBM traffic 4x below uint32.
        mask = jax.random.bits(dropout_key, (rows_p, dh_p), dtype=jnp.uint8)
        in_specs.append(mask_spec)
        operands.append(mask)

    kernel = functools.partial(
        _ffn_kernel, dropout_p=float(dropout_p), dropout_impl=dropout_impl,
        tiled=tiled, use_acc=use_acc)

    vmem_limit = int(min(budget, max(int(est * 1.5), 32 * 1024 * 1024)))

    out_p = pl.pallas_call(
        kernel,
        out_shape=jax.ShapeDtypeStruct((rows_p, dm_p), out_dtype),
        grid_spec=pltpu.PrefetchScalarGridSpec(
            num_scalar_prefetch=num_prefetch,
            grid=grid,
            in_specs=in_specs,
            out_specs=out_spec,
            scratch_shapes=scratch,
        ),
        compiler_params=pltpu.CompilerParams(
            dimension_semantics=dim_sem,
            vmem_limit_bytes=vmem_limit,
        ),
    )(*scalar_ops, *operands)

    return out_p[:rows, :d_model].reshape(batch, seq, d_model)


def feed_forward_net(x, w1t, b1, w2t, b2, *, dropout_p: float = 0.0,
                     dropout_key=None, compute_dtype=None,
                     block_rows: int = 512, hidden_tile: int = 1024,
                     dropout_impl: str = "auto"):
    """Forward pass of PyTorch FeedForwardNet (training mode when dropout_p>0).

    x: (batch, seq, d_model); w1t: (d_model, d_hidden); w2t: (d_hidden, d_model)
    (weights stored pre-transposed to (in, out)).  dropout_impl: "auto" tries
    in-kernel PRNG and falls back to a host uint8 mask; "prng"/"mask" force a path.
    compute_dtype (e.g. jnp.bfloat16) casts x/W1/W2 for HBM + MXU savings while
    keeping f32 accumulation; the output stays in the caller's dtype."""
    if not (0.0 <= dropout_p < 1.0):
        raise ValueError("dropout_p must be in [0, 1)")
    if dropout_p > 0.0 and dropout_key is None:
        raise ValueError("dropout_p > 0 requires a dropout_key")

    common = dict(compute_dtype=compute_dtype, block_rows=block_rows,
                  hidden_tile=hidden_tile)

    if dropout_p == 0.0:
        return _ffn_forward(x, w1t, b1, w2t, b2, dropout_p=0.0, dropout_key=None,
                            dropout_impl="none", **common)

    if dropout_impl in ("auto", "prng"):
        try:
            out = _ffn_forward(x, w1t, b1, w2t, b2, dropout_p=dropout_p,
                               dropout_key=dropout_key, dropout_impl="prng",
                               **common)
            return jax.block_until_ready(out)
        except Exception:
            if dropout_impl == "prng":
                raise
            # Fall back to the host-generated uint8 mask path below.
    return _ffn_forward(x, w1t, b1, w2t, b2, dropout_p=dropout_p,
                        dropout_key=dropout_key, dropout_impl="mask", **common)


# --------------------------------------------------------------------------- #
# Parameter init (nn.Linear default init, weights stored as (in, out))
# --------------------------------------------------------------------------- #
def _init_params(key, d_model, d_hidden, dtype=jnp.float32):
    k1, k2, k3, k4 = jax.random.split(key, 4)
    bound1 = 1.0 / math.sqrt(d_model)
    bound2 = 1.0 / math.sqrt(d_hidden)
    w1t = jax.random.uniform(k1, (d_model, d_hidden), dtype, -bound1, bound1)
    b1 = jax.random.uniform(k2, (d_hidden,), dtype, -bound1, bound1)
    w2t = jax.random.uniform(k3, (d_hidden, d_model), dtype, -bound2, bound2)
    b2 = jax.random.uniform(k4, (d_model,), dtype, -bound2, bound2)
    return w1t, b1, w2t, b2


if __name__ == "__main__":
    batch, seq, d_model, d_hidden = 2, 8, 32, 64
    dropout = 0.1

    key = jax.random.PRNGKey(0)
    kx, kp, kd = jax.random.split(key, 3)
    x = jax.random.normal(kx, (batch, seq, d_model), dtype=jnp.float32)
    w1t, b1, w2t, b2 = _init_params(kp, d_model, d_hidden)

    # 1) eval path (dropout disabled) vs pure-JAX reference
    out_eval = jax.block_until_ready(
        feed_forward_net(x, w1t, b1, w2t, b2, dropout_p=0.0))
    ref = jnp.maximum(x @ w1t + b1, 0.0) @ w2t + b2
    assert jnp.allclose(out_eval, ref, atol=1e-4, rtol=1e-4), "mismatch vs reference"

    # 2) mixed-precision path (bf16 weights/activations, f32 accumulation)
    out_bf16 = jax.block_until_ready(
        feed_forward_net(x, w1t, b1, w2t, b2, dropout_p=0.0,
                         compute_dtype=jnp.bfloat16))
    assert out_bf16.dtype == x.dtype
    assert jnp.allclose(out_bf16, ref, atol=5e-2, rtol=5e-2), "bf16 path too far off"

    # 3) training path (dropout active; in-kernel PRNG, host-mask fallback)
    out_train = jax.block_until_ready(
        feed_forward_net(x, w1t, b1, w2t, b2, dropout_p=dropout, dropout_key=kd))
    assert out_train.shape == (batch, seq, d_model)
    assert bool(jnp.all(jnp.isfinite(out_train)))
    assert not jnp.allclose(out_train, out_eval), "dropout had no effect"

    print("KERNEL_OK")
</pallas_src>

<mosaic_0001>
module attributes {stable_mosaic.version = 11 : i64} {
  func.func @_ffn_kernel(%arg0: i32, %arg1: memref<16x128xf32, #tpu.memory_space<vmem>>, %arg2: memref<128x128xf32, #tpu.memory_space<vmem>>, %arg3: memref<1x128xf32, #tpu.memory_space<vmem>>, %arg4: memref<128x128xf32, #tpu.memory_space<vmem>>, %arg5: memref<1x128xf32, #tpu.memory_space<vmem>>, %arg6: memref<16x128xf32, #tpu.memory_space<vmem>>) attributes {dimension_semantics = [#tpu.dimension_semantics<parallel>], iteration_bounds = array<i64: 1>, scalar_prefetch = 0 : i64, scratch_operands = 0 : i64, tpu.core_type = #tpu.core_type<tc>, window_params = [{transform_indices = @transform_0, window_bounds = array<i64: 16, 128>}, {pipeline_mode = #tpu.pipeline_mode<synchronous>, transform_indices = @transform_1, window_bounds = array<i64: 128, 128>}, {pipeline_mode = #tpu.pipeline_mode<synchronous>, transform_indices = @transform_2, window_bounds = array<i64: 1, 128>}, {pipeline_mode = #tpu.pipeline_mode<synchronous>, transform_indices = @transform_3, window_bounds = array<i64: 128, 128>}, {pipeline_mode = #tpu.pipeline_mode<synchronous>, transform_indices = @transform_4, window_bounds = array<i64: 1, 128>}, {transform_indices = @transform_5, window_bounds = array<i64: 16, 128>}]} {
    %c0 = arith.constant 0 : index
    %c0_0 = arith.constant 0 : index
    %0 = vector.load %arg1[%c0, %c0_0] : memref<16x128xf32, #tpu.memory_space<vmem>>, vector<16x128xf32>
    %c0_1 = arith.constant 0 : index
    %c0_2 = arith.constant 0 : index
    %1 = vector.load %arg2[%c0_1, %c0_2] : memref<128x128xf32, #tpu.memory_space<vmem>>, vector<128x128xf32>
    %cst = arith.constant dense<0.000000e+00> : vector<16x128xf32>
    %2 = tpu.matmul %0, %1, %cst {dimension_numbers = #tpu.dot_dimension_numbers<[1], [0], [0], [1], [0, 0, 1, 1], [], []>} : vector<16x128xf32>, vector<128x128xf32>, vector<16x128xf32> -> vector<16x128xf32>
    %c0_3 = arith.constant 0 : index
    %c0_4 = arith.constant 0 : index
    %3 = vector.load %arg3[%c0_3, %c0_4] : memref<1x128xf32, #tpu.memory_space<vmem>>, vector<1x128xf32>
    %4 = vector.broadcast %3 : vector<1x128xf32> to vector<16x128xf32>
    %5 = arith.addf %2, %4 : vector<16x128xf32>
    %cst_5 = arith.constant 0.000000e+00 : f32
    %6 = vector.broadcast %cst_5 : f32 to vector<16x128xf32>
    %7 = arith.maximumf %5, %6 : vector<16x128xf32>
    %c0_6 = arith.constant 0 : index
    %c0_7 = arith.constant 0 : index
    %8 = vector.load %arg4[%c0_6, %c0_7] : memref<128x128xf32, #tpu.memory_space<vmem>>, vector<128x128xf32>
    %cst_8 = arith.constant dense<0.000000e+00> : vector<16x128xf32>
    %9 = tpu.matmul %7, %8, %cst_8 {dimension_numbers = #tpu.dot_dimension_numbers<[1], [0], [0], [1], [0, 0, 1, 1], [], []>} : vector<16x128xf32>, vector<128x128xf32>, vector<16x128xf32> -> vector<16x128xf32>
    %c0_9 = arith.constant 0 : index
    %c0_10 = arith.constant 0 : index
    %10 = vector.load %arg5[%c0_9, %c0_10] : memref<1x128xf32, #tpu.memory_space<vmem>>, vector<1x128xf32>
    %11 = vector.broadcast %10 : vector<1x128xf32> to vector<16x128xf32>
    %12 = arith.addf %9, %11 : vector<16x128xf32>
    %c0_11 = arith.constant 0 : index
    %c0_12 = arith.constant 0 : index
    %13 = vector.load %arg6[%c0_11, %c0_12] : memref<16x128xf32, #tpu.memory_space<vmem>>, vector<16x128xf32>
    tpu.vector_store %arg6[%c0_11, %c0_12], %12 {strides = array<i32>} : memref<16x128xf32, #tpu.memory_space<vmem>>, vector<16x128xf32>,
    return
  }
  func.func @transform_0(%arg0: i32) -> (i32, i32) {
    %c0_i32 = arith.constant 0 : i32
    %c0_i32_0 = arith.constant 0 : i32
    return %arg0, %c0_i32 : i32, i32
  }
  func.func @transform_1(%arg0: i32) -> (i32, i32) {
    %c0_i32 = arith.constant 0 : i32
    %c0_i32_0 = arith.constant 0 : i32
    %c0_i32_1 = arith.constant 0 : i32
    return %c0_i32, %c0_i32_0 : i32, i32
  }
  func.func @transform_2(%arg0: i32) -> (i32, i32) {
    %c0_i32 = arith.constant 0 : i32
    %c0_i32_0 = arith.constant 0 : i32
    %c0_i32_1 = arith.constant 0 : i32
    return %c0_i32, %c0_i32_0 : i32, i32
  }
  func.func @transform_3(%arg0: i32) -> (i32, i32) {
    %c0_i32 = arith.constant 0 : i32
    %c0_i32_0 = arith.constant 0 : i32
    %c0_i32_1 = arith.constant 0 : i32
    return %c0_i32, %c0_i32_0 : i32, i32
  }
  func.func @transform_4(%arg0: i32) -> (i32, i32) {
    %c0_i32 = arith.constant 0 : i32
    %c0_i32_0 = arith.constant 0 : i32
    %c0_i32_1 = arith.constant 0 : i32
    return %c0_i32, %c0_i32_0 : i32, i32
  }
  func.func @transform_5(%arg0: i32) -> (i32, i32) {
    %c0_i32 = arith.constant 0 : i32
    %c0_i32_0 = arith.constant 0 : i32
    return %arg0, %c0_i32 : i32, i32
  }
}

</mosaic_0001>

<llo_original>
// kernel: tpu_custom_call.1
$region0: #{tpu_custom_call.1}
  #allocation0 [shape = 'u32[]', space=smem, size = 0x4, offset = 0x4, fixed_abs, tag = 'smem constant byte address 0x4 - core index']
  #allocation1 [shape = 'u32[144,128]{1,0:T(1,128)}', space=vmem, size = 0x12000, scoped, tag = 'internal scratch']
  %s0 = inlined_call_operand.hbm [shape: f32[16,128], index: 0, kind: input, shape index: {}]
  %s1 = inlined_call_operand.hbm [shape: f32[128,128], index: 1, kind: input, shape index: {}]
  %s2 = inlined_call_operand.vmem [shape: f32[1,128], index: 2, kind: input, shape index: {}]
  %s3 = inlined_call_operand.hbm [shape: f32[128,128], index: 3, kind: input, shape index: {}]
  %s4 = inlined_call_operand.vmem [shape: f32[1,128], index: 4, kind: input, shape index: {}]
  %s5 = inlined_call_operand.hbm [shape: f32[16,128], index: 5, kind: output, shape index: {}]
  %s6 = sld [smem:[#allocation0]]
  $region42: #{tpu_custom_call.1} parent=0
    _
  %s8 = ssub.s32 1, %s6
  %s9 = scalar_select 0, %s8, %s6
  $region1: #{tpu_custom_call.1} parent=0
    #allocation2 [shape = 'u8[8192]{0}', space=vmem, size = 0x2000, scoped, tag = 'input window, operand 0, single buffered']
    #allocation3 [shape = 's32[1]{0}', space=sflag, size = 0x4, scoped, tag = 'scoped memory for tpu_custom_call.1']
    #allocation4 [shape = 's32[1]{0}', space=sflag, size = 0x4, scoped, tag = 'scoped memory for tpu_custom_call.1']
    #allocation5 [shape = 'u8[65536]{0}', space=vmem, size = 0x10000, scoped, tag = 'input window, operand 1, single buffered']
    #allocation6 [shape = 's32[1]{0}', space=sflag, size = 0x4, scoped, tag = 'scoped memory for tpu_custom_call.1']
    #allocation7 [shape = 'u8[65536]{0}', space=vmem, size = 0x10000, scoped, tag = 'input window, operand 3, single buffered']
    #allocation8 [shape = 'u8[8192]{0}', space=vmem, size = 0x2000, scoped, tag = 'output window, operand 0, single buffered']
    %10 = vsyncpa [#allocation3], 0
    %11 = vsyncpa [#allocation6], 0
    %12 = vsyncpa [#allocation4], 0
    // Predicated region
    $region2: #{tpu_custom_call.1} parent=1 // pred_check
      _
    $region3: #{tpu_custom_call.1} parent=1 // pred_check_branch
      %14 = sbr.rel (0) target = $region5
    $region4: #{tpu_custom_call.1} parent=1 // pred_region
      %s16 = ssub.s32 256, 256
      %17 = vsyncadd [#allocation3], %s16
      %s18 = sshll.u32 [#allocation2], 4
      %s19 = int_to_ptr.vmem [resolvable:$true] %s18
      %24 = dma.hbm_to_vmem [thread:$0]  %s0, 256, %s19, [#allocation3], 128, 128, 8
    $region5: #{tpu_custom_call.1} parent=1 // pred_fallthru
      _
    // Predicated region
    $region6: #{tpu_custom_call.1} parent=1 // pred_check
      _
    $region7: #{tpu_custom_call.1} parent=1 // pred_check_branch
      %26 = sbr.rel (0) target = $region9
    $region8: #{tpu_custom_call.1} parent=1 // pred_region
      %s28 = ssub.s32 2048, 2048
      %29 = vsyncadd [#allocation6], %s28
      %s30 = sshll.u32 [#allocation5], 4
      %s31 = int_to_ptr.vmem [resolvable:$true] %s30
      %36 = dma.hbm_to_vmem [thread:$0]  %s1, 2048, %s31, [#allocation6], 128, 128, 8
    $region9: #{tpu_custom_call.1} parent=1 // pred_fallthru
      _
    // Predicated region
    $region10: #{tpu_custom_call.1} parent=1 // pred_check
      _
    $region11: #{tpu_custom_call.1} parent=1 // pred_check_branch
      %38 = sbr.rel (0) target = $region13
    $region12: #{tpu_custom_call.1} parent=1 // pred_region
      _
    $region13: #{tpu_custom_call.1} parent=1 // pred_fallthru
      _
    // Predicated region
    $region14: #{tpu_custom_call.1} parent=1 // pred_check
      _
    $region15: #{tpu_custom_call.1} parent=1 // pred_check_branch
      %40 = sbr.rel (0) target = $region17
    $region16: #{tpu_custom_call.1} parent=1 // pred_region
      %s42 = ssub.s32 2048, 2048
      %43 = vsyncadd [#allocation6], %s42
      %s44 = sshll.u32 [#allocation7], 4
      %s45 = int_to_ptr.vmem [resolvable:$true] %s44
      %50 = dma.hbm_to_vmem [thread:$0]  %s3, 2048, %s45, [#allocation6], 128, 128, 8
    $region17: #{tpu_custom_call.1} parent=1 // pred_fallthru
      _
    // Predicated region
    $region18: #{tpu_custom_call.1} parent=1 // pred_check
      _
    $region19: #{tpu_custom_call.1} parent=1 // pred_check_branch
      %52 = sbr.rel (0) target = $region21
    $region20: #{tpu_custom_call.1} parent=1 // pred_region
      _
    $region21: #{tpu_custom_call.1} parent=1 // pred_fallthru
      _
    // Predicated region
    $region22: #{tpu_custom_call.1} parent=1 // pred_check
      _
    $region23: #{tpu_custom_call.1} parent=1 // pred_check_branch
      %54 = sbr.rel (0) target = $region25
    $region24: #{tpu_custom_call.1} parent=1 // pred_region
      %55 = dma.done [#allocation3], 256
    $region25: #{tpu_custom_call.1} parent=1 // pred_fallthru
      _
    // Predicated region
    $region26: #{tpu_custom_call.1} parent=1 // pred_check
      _
    $region27: #{tpu_custom_call.1} parent=1 // pred_check_branch
      %57 = sbr.rel (0) target = $region29
    $region28: #{tpu_custom_call.1} parent=1 // pred_region
      %58 = dma.done [#allocation6], 2048
    $region29: #{tpu_custom_call.1} parent=1 // pred_fallthru
      _
    // Predicated region
    $region30: #{tpu_custom_call.1} parent=1 // pred_check
      _
    $region31: #{tpu_custom_call.1} parent=1 // pred_check_branch
      %60 = sbr.rel (0) target = $region33
    $region32: #{tpu_custom_call.1} parent=1 // pred_region
      %61 = dma.done [#allocation6], 2048
    $region33: #{tpu_custom_call.1} parent=1 // pred_fallthru
      _
    %v62 = vld [vmem:[#allocation2] sm:$0xff]
    %v63 = vld [vmem:[#allocation2 + $0x8] sm:$0xff]
    %v64 = vld [vmem:[#allocation5] sm:$0xff]
    %v65 = vld [vmem:[#allocation5 + $0x8] sm:$0xff]
    %v66 = vld [vmem:[#allocation5 + $0x10] sm:$0xff]
    %v67 = vld [vmem:[#allocation5 + $0x18] sm:$0xff]
    %v68 = vld [vmem:[#allocation5 + $0x20] sm:$0xff]
    %v69 = vld [vmem:[#allocation5 + $0x28] sm:$0xff]
    %v70 = vld [vmem:[#allocation5 + $0x30] sm:$0xff]
    %v71 = vld [vmem:[#allocation5 + $0x38] sm:$0xff]
    %v72 = vld [vmem:[#allocation5 + $0x40] sm:$0xff]
    %v73 = vld [vmem:[#allocation5 + $0x48] sm:$0xff]
    %v74 = vld [vmem:[#allocation5 + $0x50] sm:$0xff]
    %v75 = vld [vmem:[#allocation5 + $0x58] sm:$0xff]
    %v76 = vld [vmem:[#allocation5 + $0x60] sm:$0xff]
    %v77 = vld [vmem:[#allocation5 + $0x68] sm:$0xff]
    %v78 = vld [vmem:[#allocation5 + $0x70] sm:$0xff]
    %v79 = vld [vmem:[#allocation5 + $0x78] sm:$0xff]
    %v80 = vld [vmem:[%s2] sm:$0x1]
    %v82 = vlaneseq
    %v83 = vshrl.u32 %v82, 7
    %v84 = vsub.s32 0, %v83
    %v85 = vrot.slane %v80, %v84
    %87 = vmatprep.subr.mxu0 0.0
    %88 = vmatpush1.msra.mxu0 %v79
    %89 = vmatprep.subr.mxu0 0.0
    %90 = vmatpush1.msra.mxu0 %v78
    %91 = vmatprep.subr.mxu0 0.0
    %92 = vmatpush1.msra.mxu0 %v77
    %93 = vmatprep.subr.mxu0 0.0
    %94 = vmatpush1.msra.mxu0 %v76
    %95 = vmatprep.subr.mxu0 0.0
    %96 = vmatpush1.msra.mxu0 %v75
    %97 = vmatprep.subr.mxu0 0.0
    %98 = vmatpush1.msra.mxu0 %v74
    %99 = vmatprep.subr.mxu0 0.0
    %100 = vmatpush1.msra.mxu0 %v73
    %101 = vmatprep.subr.mxu0 0.0
    %102 = vmatpush1.msra.mxu0 %v72
    %103 = vmatprep.subr.mxu0 0.0
    %104 = vmatpush1.msra.mxu0 %v71
    %105 = vmatprep.subr.mxu0 0.0
    %106 = vmatpush1.msra.mxu0 %v70
    %107 = vmatprep.subr.mxu0 0.0
    %108 = vmatpush1.msra.mxu0 %v69
    %109 = vmatprep.subr.mxu0 0.0
    %110 = vmatpush1.msra.mxu0 %v68
    %111 = vmatprep.subr.mxu0 0.0
    %112 = vmatpush1.msra.mxu0 %v67
    %113 = vmatprep.subr.mxu0 0.0
    %114 = vmatpush1.msra.mxu0 %v66
    %115 = vmatprep.subr.mxu0 0.0
    %116 = vmatpush1.msra.mxu0 %v65
    %117 = vmatprep.subr.mxu0 0.0
    %118 = vmatpush1.msra.mxu0 %v64
    %119 = vmatprep.subr.mxu0 0.0
    %120 = vmatpush2.msra.mxu0 0.0
    %121 = vmatprep.subr.mxu0 0.0
    %122 = vmatpush2.msra.mxu0 0.0
    %123 = vmatprep.subr.mxu0 0.0
    %124 = vmatpush2.msra.mxu0 0.0
    %125 = vmatprep.subr.mxu0 0.0
    %126 = vmatpush2.msra.mxu0 0.0
    %127 = vmatprep.subr.mxu0 0.0
    %128 = vmatpush2.msra.mxu0 0.0
    %129 = vmatprep.subr.mxu0 0.0
    %130 = vmatpush2.msra.mxu0 0.0
    %131 = vmatprep.subr.mxu0 0.0
    %132 = vmatpush2.msra.mxu0 0.0
    %133 = vmatprep.subr.mxu0 0.0
    %134 = vmatpush2.msra.mxu0 0.0
    %135 = vmatprep.subr.mxu0 0.0
    %136 = vmatpush2.msra.mxu0 0.0
    %137 = vmatprep.subr.mxu0 0.0
    %138 = vmatpush2.msra.mxu0 0.0
    %139 = vmatprep.subr.mxu0 0.0
    %140 = vmatpush2.msra.mxu0 0.0
    %141 = vmatprep.subr.mxu0 0.0
    %142 = vmatpush2.msra.mxu0 0.0
    %143 = vmatprep.subr.mxu0 0.0
    %144 = vmatpush2.msra.mxu0 0.0
    %145 = vmatprep.subr.mxu0 0.0
    %146 = vmatpush2.msra.mxu0 0.0
    %147 = vmatprep.subr.mxu0 0.0
    %148 = vmatpush2.msra.mxu0 0.0
    %149 = vmatprep.subr.mxu0 0.0
    %150 = vmatpush2.msra.mxu0 0.0
    %151 = vmatprep.mubr.f32.mxu0 0.0
    %152 = vmatmul.mubr.f32.gmra.mxu0 %v62
    %v153 = vpop.f32.mrf.mxu0
    %v154 = vadd.f32 %v85, %v153
    %v155 = vpop.f32.mrf.mxu0
    %156 = vmatprep.mubr.f32.mxu0 0.0
    %157 = vmatmul.mubr.f32.gmra.mxu0 %v63
    %v158 = vpop.f32.mrf.mxu0
    %v159 = vadd.f32 %v85, %v158
    %v160 = vpop.f32.mrf.mxu0
    %161 = vdwg.mxu0
    %v162 = vmax.f32 %v154, 0.0
    %v163 = vmax.f32 %v159, 0.0
    %v164 = vld [vmem:[#allocation7] sm:$0xff]
    %v165 = vld [vmem:[#allocation7 + $0x8] sm:$0xff]
    %v166 = vld [vmem:[#allocation7 + $0x10] sm:$0xff]
    %v167 = vld [vmem:[#allocation7 + $0x18] sm:$0xff]
    %v168 = vld [vmem:[#allocation7 + $0x20] sm:$0xff]
    %v169 = vld [vmem:[#allocation7 + $0x28] sm:$0xff]
    %v170 = vld [vmem:[#allocation7 + $0x30] sm:$0xff]
    %v171 = vld [vmem:[#allocation7 + $0x38] sm:$0xff]
    %v172 = vld [vmem:[#allocation7 + $0x40] sm:$0xff]
    %v173 = vld [vmem:[#allocation7 + $0x48] sm:$0xff]
    %v174 = vld [vmem:[#allocation7 + $0x50] sm:$0xff]
    %v175 = vld [vmem:[#allocation7 + $0x58] sm:$0xff]
    %v176 = vld [vmem:[#allocation7 + $0x60] sm:$0xff]
    %v177 = vld [vmem:[#allocation7 + $0x68] sm:$0xff]
    %v178 = vld [vmem:[#allocation7 + $0x70] sm:$0xff]
    %v179 = vld [vmem:[#allocation7 + $0x78] sm:$0xff]
    %v180 = vld [vmem:[%s4] sm:$0x1]
    %v182 = vlaneseq
    %v183 = vshrl.u32 %v182, 7
    %v184 = vsub.s32 0, %v183
    %v185 = vrot.slane %v180, %v184
    %187 = vmatprep.subr.mxu0 0.0
    %188 = vmatpush1.msra.mxu0 %v179
    %189 = vmatprep.subr.mxu0 0.0
    %190 = vmatpush1.msra.mxu0 %v178
    %191 = vmatprep.subr.mxu0 0.0
    %192 = vmatpush1.msra.mxu0 %v177
    %193 = vmatprep.subr.mxu0 0.0
    %194 = vmatpush1.msra.mxu0 %v176
    %195 = vmatprep.subr.mxu0 0.0
    %196 = vmatpush1.msra.mxu0 %v175
    %197 = vmatprep.subr.mxu0 0.0
    %198 = vmatpush1.msra.mxu0 %v174
    %199 = vmatprep.subr.mxu0 0.0
    %200 = vmatpush1.msra.mxu0 %v173
    %201 = vmatprep.subr.mxu0 0.0
    %202 = vmatpush1.msra.mxu0 %v172
    %203 = vmatprep.subr.mxu0 0.0
    %204 = vmatpush1.msra.mxu0 %v171
    %205 = vmatprep.subr.mxu0 0.0
    %206 = vmatpush1.msra.mxu0 %v170
    %207 = vmatprep.subr.mxu0 0.0
    %208 = vmatpush1.msra.mxu0 %v169
    %209 = vmatprep.subr.mxu0 0.0
    %210 = vmatpush1.msra.mxu0 %v168
    %211 = vmatprep.subr.mxu0 0.0
    %212 = vmatpush1.msra.mxu0 %v167
    %213 = vmatprep.subr.mxu0 0.0
    %214 = vmatpush1.msra.mxu0 %v166
    %215 = vmatprep.subr.mxu0 0.0
    %216 = vmatpush1.msra.mxu0 %v165
    %217 = vmatprep.subr.mxu0 0.0
    %218 = vmatpush1.msra.mxu0 %v164
    %219 = vmatprep.subr.mxu0 0.0
    %220 = vmatpush2.msra.mxu0 0.0
    %221 = vmatprep.subr.mxu0 0.0
    %222 = vmatpush2.msra.mxu0 0.0
    %223 = vmatprep.subr.mxu0 0.0
    %224 = vmatpush2.msra.mxu0 0.0
    %225 = vmatprep.subr.mxu0 0.0
    %226 = vmatpush2.msra.mxu0 0.0
    %227 = vmatprep.subr.mxu0 0.0
    %228 = vmatpush2.msra.mxu0 0.0
    %229 = vmatprep.subr.mxu0 0.0
    %230 = vmatpush2.msra.mxu0 0.0
    %231 = vmatprep.subr.mxu0 0.0
    %232 = vmatpush2.msra.mxu0 0.0
    %233 = vmatprep.subr.mxu0 0.0
    %234 = vmatpush2.msra.mxu0 0.0
    %235 = vmatprep.subr.mxu0 0.0
    %236 = vmatpush2.msra.mxu0 0.0
    %237 = vmatprep.subr.mxu0 0.0
    %238 = vmatpush2.msra.mxu0 0.0
    %239 = vmatprep.subr.mxu0 0.0
    %240 = vmatpush2.msra.mxu0 0.0
    %241 = vmatprep.subr.mxu0 0.0
    %242 = vmatpush2.msra.mxu0 0.0
    %243 = vmatprep.subr.mxu0 0.0
    %244 = vmatpush2.msra.mxu0 0.0
    %245 = vmatprep.subr.mxu0 0.0
    %246 = vmatpush2.msra.mxu0 0.0
    %247 = vmatprep.subr.mxu0 0.0
    %248 = vmatpush2.msra.mxu0 0.0
    %249 = vmatprep.subr.mxu0 0.0
    %250 = vmatpush2.msra.mxu0 0.0
    %251 = vmatprep.mubr.f32.mxu0 0.0
    %252 = vmatmul.mubr.f32.gmra.mxu0 %v162
    %v253 = vpop.f32.mrf.mxu0
    %v254 = vadd.f32 %v185, %v253
    %v255 = vpop.f32.mrf.mxu0
    %256 = vmatprep.mubr.f32.mxu0 0.0
    %257 = vmatmul.mubr.f32.gmra.mxu0 %v163
    %v258 = vpop.f32.mrf.mxu0
    %v259 = vadd.f32 %v185, %v258
    %v260 = vpop.f32.mrf.mxu0
    %261 = vdwg.mxu0
    %262 = vst [vmem:[#allocation8] sm:$0xff] %v254
    %263 = vst [vmem:[#allocation8 + $0x8] sm:$0xff] %v259
    // Predicated region
    $region34: #{tpu_custom_call.1} parent=1 // pred_check
      _
    $region35: #{tpu_custom_call.1} parent=1 // pred_check_branch
      %265 = sbr.rel (0) target = $region37
    $region36: #{tpu_custom_call.1} parent=1 // pred_region
      %s267 = ssub.s32 256, 256
      %268 = vsyncadd [#allocation4], %s267
      %s269 = sshll.u32 [#allocation8], 4
      %s270 = int_to_ptr.vmem [resolvable:$true] %s269
      %275 = dma.vmem_to_hbm [thread:$0]  %s270, 256, %s5, [#allocation4], 128, 128, 8
    $region37: #{tpu_custom_call.1} parent=1 // pred_fallthru
      _
    // Predicated region
    $region38: #{tpu_custom_call.1} parent=1 // pred_check
      _
    $region39: #{tpu_custom_call.1} parent=1 // pred_check_branch
      %277 = sbr.rel (0) target = $region41
    $region40: #{tpu_custom_call.1} parent=1 // pred_region
      %278 = dma.done [#allocation4], 256
    $region41: #{tpu_custom_call.1} parent=1 // pred_fallthru
      _
    %279 = vsyncpa [#allocation3], 1
    %280 = vsyncpa [#allocation6], 1
    %281 = vsyncpa [#allocation4], 1

</llo_original>
